<compile_context>
chip_gen: v6e
topology: v6e:2x2x1
jax: 0.10.0
libtpu: 0.0.40
codegen_flags: <defaults>
</compile_context>

<pallas_src>
import functools
import math

import jax
import jax.numpy as jnp
from jax import lax
from jax.experimental import pallas as pl
from jax.experimental.pallas import tpu as pltpu

_LANES = 128
_SUBLANES = 8
_MAX_TILE_ROWS = 8192                    # (8192, 128) f32 tile = 4 MiB / input / buffer
_VMEM_LIMIT_BYTES = 48 * 1024 * 1024     # 2 inputs x 2 buffers + elementwise temps


def _round_up(x, m):
    return (x + m - 1) // m * m


def _cdiv(a, b):
    return (a + b - 1) // b


def _sublane_align(dtype):
    itemsize = jnp.dtype(dtype).itemsize
    if itemsize >= 4:
        return 8
    if itemsize == 2:
        return 16
    return 32


# ----------------------------------------------------------------------------
# Main Charbonnier sum: sum(sqrt((o-g)^2 + n^2)) over all elements.
# ----------------------------------------------------------------------------
def _charbonnier_partial_kernel(o_ref, g_ref, out_ref, *, nn, needs_mask,
                                valid_rows_last):
    """One lane-dense (tile_rows, 128) tile -> (8, 128) partial-sum block."""
    o = o_ref[...].astype(jnp.float32)
    g = g_ref[...].astype(jnp.float32)
    x = o - g
    charb = jnp.sqrt(x * x + jnp.float32(nn))

    def _partial(v):
        # (tile_rows, 128) -> (tile_rows//8, 8, 128), reduce leading dim with
        # elementwise VPU adds; the final cross-lane reduce is in the wrapper.
        return v.reshape(-1, _SUBLANES, _LANES).sum(axis=0)

    if needs_mask:
        # Only the last tile can contain padded (out-of-range) rows, so the
        # iota/compare/select is gated to that single grid step.  The mask is
        # tile-local (row index < static count), so no int32 overflow for
        # arbitrarily large tensors.
        i = pl.program_id(0)
        last = pl.num_programs(0) - 1

        @pl.when(i != last)
        def _():
            out_ref[...] = _partial(charb)

        @pl.when(i == last)
        def _():
            row = lax.broadcasted_iota(jnp.int32, charb.shape, 0)
            masked = jnp.where(row < valid_rows_last, charb, 0.0)
            out_ref[...] = _partial(masked)
    else:
        out_ref[...] = _partial(charb)


def _charbonnier_sum(output, gt, *, nn, max_tile_rows=_MAX_TILE_ROWS):
    numel = math.prod(output.shape)
    o_flat = output.reshape(-1)
    g_flat = gt.reshape(-1)

    # Ragged (<128 element) tail is handled with plain jnp in the wrapper so we
    # never materialize a full-tensor padded copy of both inputs.
    tail = numel % _LANES
    aligned = numel - tail
    tail_sum = jnp.float32(0.0)
    if tail:
        do = (o_flat[aligned:].astype(jnp.float32)
              - g_flat[aligned:].astype(jnp.float32))
        tail_sum = jnp.sum(jnp.sqrt(do * do + jnp.float32(nn)))
        if aligned == 0:
            return tail_sum
        # TODO(synk): a manual-DMA (memory_space=pl.ANY) path could avoid any
        # prefix materialization XLA decides to do for this static slice.
        o_flat = o_flat[:aligned]
        g_flat = g_flat[:aligned]

    rows = aligned // _LANES
    o2 = o_flat.reshape(rows, _LANES)
    g2 = g_flat.reshape(rows, _LANES)

    # Sublane alignment for the block's second-minor dim depends on the packed
    # dtype (8 for 32-bit, 16 for bf16/f16, 32 for 8-bit).
    align = max(_sublane_align(o2.dtype), _sublane_align(g2.dtype))
    tile_rows = min(max_tile_rows, _round_up(rows, align))
    tile_rows = _round_up(tile_rows, align)
    num_tiles = _cdiv(rows, tile_rows)
    needs_mask = num_tiles * tile_rows != rows       # padding exists (incl. block > array)
    valid_rows_last = rows - (num_tiles - 1) * tile_rows

    kernel = functools.partial(_charbonnier_partial_kernel, nn=nn,
                               needs_mask=needs_mask,
                               valid_rows_last=valid_rows_last)
    partials = pl.pallas_call(
        kernel,
        out_shape=jax.ShapeDtypeStruct((num_tiles * _SUBLANES, _LANES),
                                       jnp.float32),
        grid=(num_tiles,),
        in_specs=[
            pl.BlockSpec((tile_rows, _LANES), lambda i: (i, 0)),
            pl.BlockSpec((tile_rows, _LANES), lambda i: (i, 0)),
        ],
        out_specs=pl.BlockSpec((_SUBLANES, _LANES), lambda i: (i, 0)),
        compiler_params=pltpu.CompilerParams(
            dimension_semantics=("parallel",),
            vmem_limit_bytes=_VMEM_LIMIT_BYTES),
    )(o2, g2)
    return jnp.sum(partials) + tail_sum


# ----------------------------------------------------------------------------
# Fused Charbonnier + total-variation kernel (one HBM pass, gridded over batch).
# ----------------------------------------------------------------------------
def _fused_charb_tv_kernel(o_ref, g_ref, charb_ref, tv_ref, *, nn, C, H, W):
    # Block is one full image: (1, C, H, W).
    o = o_ref[...].astype(jnp.float32)
    g = g_ref[...].astype(jnp.float32)
    x = o - g

    charb = jnp.sum(jnp.sqrt(x * x + jnp.float32(nn)))

    tv = jnp.float32(0.0)
    # TODO(synk): for large images, H-tile with a 1-row halo and use a
    # lane-dense (W folded toward 128) layout with pltpu.roll + boundary masks
    # instead of these misaligned slice-diffs (VMEM budget / lane utilization).
    if W > 1:
        tv = tv + jnp.sum(jnp.abs(x[:, :, :, :-1] - x[:, :, :, 1:]))
    if H > 1:
        tv = tv + jnp.sum(jnp.abs(x[:, :, :-1, :] - x[:, :, 1:, :]))
    if C > 1:
        tv = tv + jnp.sum(jnp.abs(x[:, :-1, :, :] - x[:, 1:, :, :]))

    charb_ref[...] = jnp.full(charb_ref.shape, charb, dtype=jnp.float32)
    tv_ref[...] = jnp.full(tv_ref.shape, tv, dtype=jnp.float32)


def _fused_charb_tv_sums(output, gt, *, nn):
    assert output.ndim == 4, "total_variation expects NCHW inputs"
    N, C, H, W = output.shape
    kernel = functools.partial(_fused_charb_tv_kernel, nn=nn, C=C, H=H, W=W)
    charb_blocks, tv_blocks = pl.pallas_call(
        kernel,
        out_shape=(jax.ShapeDtypeStruct((N, _SUBLANES, _LANES), jnp.float32),
                   jax.ShapeDtypeStruct((N, _SUBLANES, _LANES), jnp.float32)),
        grid=(N,),
        in_specs=[
            pl.BlockSpec((1, C, H, W), lambda b: (b, 0, 0, 0)),
            pl.BlockSpec((1, C, H, W), lambda b: (b, 0, 0, 0)),
        ],
        out_specs=(pl.BlockSpec((1, _SUBLANES, _LANES), lambda b: (b, 0, 0)),
                   pl.BlockSpec((1, _SUBLANES, _LANES), lambda b: (b, 0, 0))),
        compiler_params=pltpu.CompilerParams(
            dimension_semantics=("parallel",),
            vmem_limit_bytes=_VMEM_LIMIT_BYTES),
    )(output, gt)
    # Each (8, 128) output block carries the per-image sum (replicated scalar).
    return jnp.sum(charb_blocks[:, 0, 0]), jnp.sum(tv_blocks[:, 0, 0])


# ----------------------------------------------------------------------------
# Public wrapper (matches CharbonnierPenalty.forward semantics).
# ----------------------------------------------------------------------------
def charbonnier_penalty(output, gt, *, n=0.001, total_variation=False,
                        lam=1e-06, per_pixel=False):
    assert output.shape == gt.shape, 'output and gt shapes do not match'
    numel = math.prod(output.shape)
    nn = float(n) * float(n)

    if total_variation:
        # Single fused pass: output/gt are read from HBM once.
        charb_sum, tv_sum = _fused_charb_tv_sums(output, gt, nn=nn)
        # `loss += lam * TV` adds a scalar to EVERY element of the loss tensor,
        # so after the reduction it contributes numel * lam * TV.
        s = charb_sum + jnp.float32(lam) * tv_sum * jnp.float32(numel)
    else:
        s = _charbonnier_sum(output, gt, nn=nn)

    if per_pixel:
        return s / jnp.float32(numel)          # .mean()
    return s / jnp.float32(output.shape[0])    # .sum() / batch


if __name__ == "__main__":
    key = jax.random.PRNGKey(0)
    k1, k2, k3, k4 = jax.random.split(key, 4)
    shape = (2, 4, 16, 16)                     # NCHW, small example
    output = jax.random.normal(k1, shape, dtype=jnp.float32)
    gt = jax.random.normal(k2, shape, dtype=jnp.float32)

    # Pure-JAX reference.
    def ref(o, g, n=0.001, total_variation=False, lam=1e-06, per_pixel=False):
        o = o.astype(jnp.float32); g = g.astype(jnp.float32)
        x = o - g
        l = jnp.sqrt(x * x + n * n)
        if total_variation:
            tv = (jnp.sum(jnp.abs(x[:, :, :, :-1] - x[:, :, :, 1:])) +
                  jnp.sum(jnp.abs(x[:, :, :-1, :] - x[:, :, 1:, :])) +
                  jnp.sum(jnp.abs(x[:, :-1, :, :] - x[:, 1:, :, :])))
            l = l + lam * tv
        return jnp.mean(l) if per_pixel else jnp.sum(l) / o.shape[0]

    # Default config: n=0.001, total_variation=False, per_pixel=False.
    loss = charbonnier_penalty(output, gt)
    jax.block_until_ready(loss)
    assert jnp.allclose(loss, ref(output, gt), rtol=1e-5, atol=1e-5)

    # Fused total-variation / per-pixel branch.
    loss_tv = charbonnier_penalty(output, gt, total_variation=True,
                                  lam=1e-06, per_pixel=True)
    jax.block_until_ready(loss_tv)
    assert jnp.allclose(loss_tv, ref(output, gt, total_variation=True,
                                     per_pixel=True), rtol=1e-5, atol=1e-5)

    # bf16 inputs (HBM traffic halves); compute stays f32.
    loss_bf16 = charbonnier_penalty(output.astype(jnp.bfloat16),
                                    gt.astype(jnp.bfloat16))
    jax.block_until_ready(loss_bf16)
    assert jnp.allclose(loss_bf16,
                        ref(output.astype(jnp.bfloat16),
                            gt.astype(jnp.bfloat16)),
                        rtol=1e-4, atol=1e-4)

    # Unaligned element count (numel % 128 != 0): jnp tail + block-padding mask.
    shape_u = (2, 3, 5, 7)
    ou = jax.random.normal(k3, shape_u, dtype=jnp.float32)
    gu = jax.random.normal(k4, shape_u, dtype=jnp.float32)
    loss_u = charbonnier_penalty(ou, gu)
    jax.block_until_ready(loss_u)
    assert jnp.allclose(loss_u, ref(ou, gu), rtol=1e-5, atol=1e-5)

    # Multi-tile path with a partial (masked) last tile: force tiny tiles.
    shape_m = (2, 4, 16, 18)                   # numel=2304 -> rows=18, tile=8 -> 3 tiles
    om = jax.random.normal(k3, shape_m, dtype=jnp.float32)
    gm = jax.random.normal(k4, shape_m, dtype=jnp.float32)
    s_m = _charbonnier_sum(om, gm, nn=0.001 * 0.001, max_tile_rows=8)
    jax.block_until_ready(s_m)
    dm = om - gm
    s_m_ref = jnp.sum(jnp.sqrt(dm * dm + 0.001 * 0.001))
    assert jnp.allclose(s_m, s_m_ref, rtol=1e-5, atol=1e-5)

    print("KERNEL_OK")
</pallas_src>

<mosaic_0001>
module attributes {stable_mosaic.version = 11 : i64} {
  func.func @_charbonnier_partial_kernel(%arg0: i32, %arg1: memref<16x128xf32, #tpu.memory_space<vmem>>, %arg2: memref<16x128xf32, #tpu.memory_space<vmem>>, %arg3: memref<8x128xf32, #tpu.memory_space<vmem>>) attributes {dimension_semantics = [#tpu.dimension_semantics<parallel>], iteration_bounds = array<i64: 1>, scalar_prefetch = 0 : i64, scratch_operands = 0 : i64, tpu.core_type = #tpu.core_type<tc>, window_params = [{transform_indices = @transform_0, window_bounds = array<i64: 16, 128>}, {transform_indices = @transform_1, window_bounds = array<i64: 16, 128>}, {transform_indices = @transform_2, window_bounds = array<i64: 8, 128>}]} {
    %c0 = arith.constant 0 : index
    %c0_0 = arith.constant 0 : index
    %0 = vector.load %arg1[%c0, %c0_0] : memref<16x128xf32, #tpu.memory_space<vmem>>, vector<16x128xf32>
    %c0_1 = arith.constant 0 : index
    %c0_2 = arith.constant 0 : index
    %1 = vector.load %arg2[%c0_1, %c0_2] : memref<16x128xf32, #tpu.memory_space<vmem>>, vector<16x128xf32>
    %2 = arith.subf %0, %1 : vector<16x128xf32>
    %3 = arith.mulf %2, %2 : vector<16x128xf32>
    %cst = arith.constant 9.99999997E-7 : f32
    %4 = vector.broadcast %cst : f32 to vector<16x128xf32>
    %5 = arith.addf %3, %4 : vector<16x128xf32>
    %6 = math.sqrt %5 : vector<16x128xf32>
    %7 = vector.shape_cast %6 : vector<16x128xf32> to vector<2x8x128xf32>
    %cst_3 = arith.constant dense<0.000000e+00> : vector<8x128xf32>
    %8 = vector.multi_reduction <add>, %7, %cst_3 [0] : vector<2x8x128xf32> to vector<8x128xf32>
    %c0_4 = arith.constant 0 : index
    %c0_5 = arith.constant 0 : index
    %9 = vector.load %arg3[%c0_4, %c0_5] : memref<8x128xf32, #tpu.memory_space<vmem>>, vector<8x128xf32>
    tpu.vector_store %arg3[%c0_4, %c0_5], %8 {strides = array<i32>} : memref<8x128xf32, #tpu.memory_space<vmem>>, vector<8x128xf32>,
    return
  }
  func.func @transform_0(%arg0: i32) -> (i32, i32) {
    %c0_i32 = arith.constant 0 : i32
    %c0_i32_0 = arith.constant 0 : i32
    return %arg0, %c0_i32 : i32, i32
  }
  func.func @transform_1(%arg0: i32) -> (i32, i32) {
    %c0_i32 = arith.constant 0 : i32
    %c0_i32_0 = arith.constant 0 : i32
    return %arg0, %c0_i32 : i32, i32
  }
  func.func @transform_2(%arg0: i32) -> (i32, i32) {
    %c0_i32 = arith.constant 0 : i32
    %c0_i32_0 = arith.constant 0 : i32
    return %arg0, %c0_i32 : i32, i32
  }
}

</mosaic_0001>

<llo_original>
// kernel: tpu_custom_call.1
$region0: #{tpu_custom_call.1}
  #allocation0 [shape = 'u32[]', space=smem, size = 0x4, offset = 0x4, fixed_abs, tag = 'smem constant byte address 0x4 - core index']
  #allocation1 [shape = 'u32[144,128]{1,0:T(1,128)}', space=vmem, size = 0x12000, scoped, tag = 'internal scratch']
  %s0 = inlined_call_operand.hbm [shape: f32[16,128], index: 0, kind: input, shape index: {}]
  %s1 = inlined_call_operand.hbm [shape: f32[16,128], index: 1, kind: input, shape index: {}]
  %s2 = inlined_call_operand.hbm [shape: f32[8,128], index: 2, kind: output, shape index: {}]
  %s3 = sld [smem:[#allocation0]]
  $region26: #{tpu_custom_call.1} parent=0
    _
  %s5 = ssub.s32 1, %s3
  %s6 = scalar_select 0, %s5, %s3
  $region1: #{tpu_custom_call.1} parent=0
    #allocation2 [shape = 'u8[8192]{0}', space=vmem, size = 0x2000, scoped, tag = 'input window, operand 0, single buffered']
    #allocation3 [shape = 's32[1]{0}', space=sflag, size = 0x4, scoped, tag = 'scoped memory for tpu_custom_call.1']
    #allocation4 [shape = 's32[1]{0}', space=sflag, size = 0x4, scoped, tag = 'scoped memory for tpu_custom_call.1']
    #allocation5 [shape = 'u8[8192]{0}', space=vmem, size = 0x2000, scoped, tag = 'input window, operand 1, single buffered']
    #allocation6 [shape = 's32[1]{0}', space=sflag, size = 0x4, scoped, tag = 'scoped memory for tpu_custom_call.1']
    #allocation7 [shape = 'u8[4096]{0}', space=vmem, size = 0x1000, scoped, tag = 'output window, operand 0, single buffered']
    %7 = vsyncpa [#allocation3], 0
    %8 = vsyncpa [#allocation6], 0
    %9 = vsyncpa [#allocation4], 0
    // Predicated region
    $region2: #{tpu_custom_call.1} parent=1 // pred_check
      _
    $region3: #{tpu_custom_call.1} parent=1 // pred_check_branch
      %11 = sbr.rel (0) target = $region5
    $region4: #{tpu_custom_call.1} parent=1 // pred_region
      %s13 = ssub.s32 256, 256
      %14 = vsyncadd [#allocation3], %s13
      %s15 = sshll.u32 [#allocation2], 4
      %s16 = int_to_ptr.vmem [resolvable:$true] %s15
      %21 = dma.hbm_to_vmem [thread:$0]  %s0, 256, %s16, [#allocation3], 128, 128, 8
    $region5: #{tpu_custom_call.1} parent=1 // pred_fallthru
      _
    // Predicated region
    $region6: #{tpu_custom_call.1} parent=1 // pred_check
      _
    $region7: #{tpu_custom_call.1} parent=1 // pred_check_branch
      %23 = sbr.rel (0) target = $region9
    $region8: #{tpu_custom_call.1} parent=1 // pred_region
      %s25 = ssub.s32 256, 256
      %26 = vsyncadd [#allocation6], %s25
      %s27 = sshll.u32 [#allocation5], 4
      %s28 = int_to_ptr.vmem [resolvable:$true] %s27
      %33 = dma.hbm_to_vmem [thread:$0]  %s1, 256, %s28, [#allocation6], 128, 128, 8
    $region9: #{tpu_custom_call.1} parent=1 // pred_fallthru
      _
    // Predicated region
    $region10: #{tpu_custom_call.1} parent=1 // pred_check
      _
    $region11: #{tpu_custom_call.1} parent=1 // pred_check_branch
      %35 = sbr.rel (0) target = $region13
    $region12: #{tpu_custom_call.1} parent=1 // pred_region
      %36 = dma.done [#allocation3], 256
    $region13: #{tpu_custom_call.1} parent=1 // pred_fallthru
      _
    // Predicated region
    $region14: #{tpu_custom_call.1} parent=1 // pred_check
      _
    $region15: #{tpu_custom_call.1} parent=1 // pred_check_branch
      %38 = sbr.rel (0) target = $region17
    $region16: #{tpu_custom_call.1} parent=1 // pred_region
      %39 = dma.done [#allocation6], 256
    $region17: #{tpu_custom_call.1} parent=1 // pred_fallthru
      _
    %v40 = vld [vmem:[#allocation2] sm:$0xff]
    %v41 = vld [vmem:[#allocation2 + $0x8] sm:$0xff]
    %v42 = vld [vmem:[#allocation5] sm:$0xff]
    %v43 = vld [vmem:[#allocation5 + $0x8] sm:$0xff]
    %v44 = vsub.f32 %v40, %v42
    %v45 = vsub.f32 %v41, %v43
    %v46 = vmul.f32 %v44, %v44
    %v47 = vmul.f32 %v45, %v45
    %v48 = vadd.f32 %v46, 1e-06
    %v49 = vadd.f32 %v47, 1e-06
    %v50 = vrsqrt.pop %v48
    %v51 = vmul.f32 %v48, %v50
    %vm52 = vcmp.eq.f32.partialorder %v48, inf
    %v53 = vsel %vm52, %v48, %v51
    %vm54 = vcmp.eq.f32.partialorder %v48, 0.0
    %v55 = vand.u32 %v48, 2147483648
    %v56 = vsel %vm54, %v55, %v53
    %v57 = vrsqrt.pop %v49
    %v58 = vmul.f32 %v49, %v57
    %vm59 = vcmp.eq.f32.partialorder %v49, inf
    %v60 = vsel %vm59, %v49, %v58
    %vm61 = vcmp.eq.f32.partialorder %v49, 0.0
    %v62 = vand.u32 %v49, 2147483648
    %v63 = vsel %vm61, %v62, %v60
    %v64 = vadd.f32 %v56, %v63
    %65 = vst [vmem:[#allocation7] sm:$0xff] %v64
    // Predicated region
    $region18: #{tpu_custom_call.1} parent=1 // pred_check
      _
    $region19: #{tpu_custom_call.1} parent=1 // pred_check_branch
      %67 = sbr.rel (0) target = $region21
    $region20: #{tpu_custom_call.1} parent=1 // pred_region
      %s69 = ssub.s32 128, 128
      %70 = vsyncadd [#allocation4], %s69
      %s72 = sshll.u32 [#allocation7], 4
      %s73 = int_to_ptr.vmem [resolvable:$true] %s72
      %75 = dma.vmem_to_hbm [thread:$0]  %s73, 128, %s2, [#allocation4]
    $region21: #{tpu_custom_call.1} parent=1 // pred_fallthru
      _
    // Predicated region
    $region22: #{tpu_custom_call.1} parent=1 // pred_check
      _
    $region23: #{tpu_custom_call.1} parent=1 // pred_check_branch
      %77 = sbr.rel (0) target = $region25
    $region24: #{tpu_custom_call.1} parent=1 // pred_region
      %78 = dma.done [#allocation4], 128
    $region25: #{tpu_custom_call.1} parent=1 // pred_fallthru
      _
    %79 = vsyncpa [#allocation3], 1
    %80 = vsyncpa [#allocation6], 1
    %81 = vsyncpa [#allocation4], 1

</llo_original>
